<compile_context>
chip_gen: v7x
topology: tpu7x:2x2x1
jax: 0.10.0
libtpu: 0.0.40
codegen_flags: <defaults>
</compile_context>

<pallas_src>
import functools

import jax
import jax.numpy as jnp
from jax import lax
from jax.experimental import pallas as pl
from jax.experimental.pallas import tpu as pltpu


def _distill_kl_kernel(ys_ref, yt_ref, out_ref, *, inv_t: float, batch: int):
    """One batch tile -> per-tile partial KL sum, broadcast lane-dense to out_ref."""
    tb = ys_ref.shape[0]

    # Scale logits by 1/T with a static multiply; all math in f32.
    ys = ys_ref[...].astype(jnp.float32) * inv_t
    yt = yt_ref[...].astype(jnp.float32) * inv_t

    # Stable shifted logits; form the difference early so the shifts die before
    # the exps (fewer live [tb, C] temporaries -> less VMEM spill on v5e).
    ys_shift = ys - jnp.max(ys, axis=-1, keepdims=True)
    yt_shift = yt - jnp.max(yt, axis=-1, keepdims=True)
    d = yt_shift - ys_shift

    # Student log-partition, teacher softmax pieces (normalization deferred).
    log_z_s = jnp.log(jnp.sum(jnp.exp(ys_shift), axis=-1, keepdims=True))
    exp_t = jnp.exp(yt_shift)
    z_t = jnp.sum(exp_t, axis=-1, keepdims=True)
    log_z_t = jnp.log(z_t)

    # sum_c p_t * (log p_t - log p_s)
    #   = sum_c exp_t * (yt_shift - ys_shift) / z_t + (log_z_s - log_z_t)
    s1 = jnp.sum(exp_t * d, axis=-1, keepdims=True)
    row_kl = s1 / z_t + (log_z_s - log_z_t)                      # [tb, 1]

    # Mask rows past the true batch size (the last tile may overhang the array;
    # overhang contents are unspecified, so zero their contribution).
    row_ids = pl.program_id(0) * tb + lax.broadcasted_iota(jnp.int32, (tb, 1), 0)
    row_kl = jnp.where(row_ids < batch, row_kl, 0.0)

    # Lane-dense unmasked store of this tile's partial sum.
    out_ref[...] = jnp.broadcast_to(jnp.sum(row_kl), out_ref.shape).astype(jnp.float32)


def _round_up(x: int, m: int) -> int:
    return -(-x // m) * m


def distill_kl(y_s, y_t, temperature: float, *, block_rows: int | None = None):
    """Pallas DistillKL forward. y_s, y_t: [B, C] logits (f32 or bf16). Returns scalar f32."""
    assert y_s.shape == y_t.shape and y_s.ndim == 2
    B, C = y_s.shape
    t = float(temperature)
    inv_t = 1.0 / t
    scale = (t * t) / float(B)

    # --- batch tile sizing ----------------------------------------------------
    # Per-row VMEM cost: 2 inputs x double-buffered DMA tiles (input dtype) plus
    # ~5 live f32 [tb, C] temporaries inside the body.  Budgeted conservatively
    # for v7x (64 MiB physical / 32 MiB scoped); v5e/v6e (128 MiB) have headroom.
    itemsize = jnp.dtype(y_s.dtype).itemsize
    if block_rows is None:
        c_lanes = _round_up(C, 128)                      # VMEM lane padding
        per_row = 2 * 2 * c_lanes * itemsize + 5 * c_lanes * 4
        budget = 24 * 1024 * 1024
        block_rows = budget // per_row
    tb = int(block_rows)
    tb = max(16, (tb // 16) * 16)                        # sublane multiple (bf16-safe)
    tb = min(tb, 4096, max(16, _round_up(B, 16)))

    num_tiles = pl.cdiv(B, tb)

    # No jnp.pad anywhere: class axis uses its full (possibly non-128-multiple)
    # extent as the block dim; ragged last batch tile is masked in-kernel.
    kernel = functools.partial(_distill_kl_kernel, inv_t=inv_t, batch=B)
    partials = pl.pallas_call(
        kernel,
        out_shape=jax.ShapeDtypeStruct((num_tiles, 8, 128), jnp.float32),
        grid=(num_tiles,),
        in_specs=[
            pl.BlockSpec((tb, C), lambda i: (i, 0)),
            pl.BlockSpec((tb, C), lambda i: (i, 0)),
        ],
        # One (8,128)-aligned block per tile -> no cross-tile writes, safe to
        # shard the batch axis across both TensorCores on v7x.
        out_specs=pl.BlockSpec((1, 8, 128), lambda i: (i, 0, 0)),
        compiler_params=pltpu.CompilerParams(
            dimension_semantics=("parallel",),
            vmem_limit_bytes=32 * 1024 * 1024,
        ),
    )(y_s, y_t)

    # Final tiny reduction over per-tile partials, then the static T^2/B scale.
    return jnp.sum(partials[:, 0, 0]) * jnp.float32(scale)


def _distill_kl_ref(y_s, y_t, temperature: float):
    t = jnp.float32(temperature)
    log_p_s = jax.nn.log_softmax(y_s.astype(jnp.float32) / t, axis=1)
    p_t = jax.nn.softmax(y_t.astype(jnp.float32) / t, axis=1)
    log_p_t = jax.nn.log_softmax(y_t.astype(jnp.float32) / t, axis=1)
    kl = jnp.sum(p_t * (log_p_t - log_p_s))
    return kl * t * t / y_s.shape[0]


if __name__ == "__main__":
    key = jax.random.PRNGKey(0)
    k1, k2 = jax.random.split(key)
    B, C = 40, 100        # batch, num_classes (non-multiples: exercise ragged tiles / lanes)
    T = 4.0               # distillation temperature (module __init__ arg)

    y_s = jax.random.normal(k1, (B, C), dtype=jnp.float32)  # student logits
    y_t = jax.random.normal(k2, (B, C), dtype=jnp.float32)  # teacher logits

    ref = _distill_kl_ref(y_s, y_t, T)

    # Single-tile path (auto tile sizing).
    loss = jax.block_until_ready(distill_kl(y_s, y_t, T))
    assert jnp.allclose(loss, ref, rtol=1e-5, atol=1e-5), (loss, ref)

    # Multi-tile path: block_rows=16 -> grid of 3 tiles, last one ragged (masked).
    loss_tiled = jax.block_until_ready(distill_kl(y_s, y_t, T, block_rows=16))
    assert jnp.allclose(loss_tiled, ref, rtol=1e-5, atol=1e-5), (loss_tiled, ref)

    # bf16 ingestion path (no wrapper upcast; kernel math stays f32).
    ys_bf, yt_bf = y_s.astype(jnp.bfloat16), y_t.astype(jnp.bfloat16)
    loss_bf = jax.block_until_ready(distill_kl(ys_bf, yt_bf, T))
    ref_bf = _distill_kl_ref(ys_bf, yt_bf, T)
    assert jnp.allclose(loss_bf, ref_bf, rtol=1e-4, atol=1e-4), (loss_bf, ref_bf)

    print("KERNEL_OK")
</pallas_src>

<mosaic_0001>
module attributes {stable_mosaic.version = 11 : i64} {
  func.func @_distill_kl_kernel(%arg0: i32, %arg1: memref<48x100xf32, #tpu.memory_space<vmem>>, %arg2: memref<48x100xf32, #tpu.memory_space<vmem>>, %arg3: memref<1x8x128xf32, #tpu.memory_space<vmem>>) attributes {dimension_semantics = [#tpu.dimension_semantics<parallel>], iteration_bounds = array<i64: 1>, scalar_prefetch = 0 : i64, scratch_operands = 0 : i64, tpu.core_type = #tpu.core_type<tc>, window_params = [{transform_indices = @transform_0, window_bounds = array<i64: 48, 100>}, {transform_indices = @transform_1, window_bounds = array<i64: 48, 100>}, {transform_indices = @transform_2, window_bounds = array<i64: 1, 8, 128>}]} {
    %c0 = arith.constant 0 : index
    %c0_0 = arith.constant 0 : index
    %0 = vector.load %arg1[%c0, %c0_0] : memref<48x100xf32, #tpu.memory_space<vmem>>, vector<48x100xf32>
    %cst = arith.constant 2.500000e-01 : f32
    %1 = vector.broadcast %cst : f32 to vector<48x100xf32>
    %2 = arith.mulf %0, %1 : vector<48x100xf32>
    %c0_1 = arith.constant 0 : index
    %c0_2 = arith.constant 0 : index
    %3 = vector.load %arg2[%c0_1, %c0_2] : memref<48x100xf32, #tpu.memory_space<vmem>>, vector<48x100xf32>
    %cst_3 = arith.constant 2.500000e-01 : f32
    %4 = vector.broadcast %cst_3 : f32 to vector<48x100xf32>
    %5 = arith.mulf %3, %4 : vector<48x100xf32>
    %cst_4 = arith.constant dense<0xFF800000> : vector<48xf32>
    %6 = vector.multi_reduction <maximumf>, %2, %cst_4 [1] : vector<48x100xf32> to vector<48xf32>
    %7 = vector.shape_cast %6 : vector<48xf32> to vector<48x1xf32>
    %8 = vector.broadcast %7 : vector<48x1xf32> to vector<48x100xf32>
    %9 = arith.subf %2, %8 : vector<48x100xf32>
    %cst_5 = arith.constant dense<0xFF800000> : vector<48xf32>
    %10 = vector.multi_reduction <maximumf>, %5, %cst_5 [1] : vector<48x100xf32> to vector<48xf32>
    %11 = vector.shape_cast %10 : vector<48xf32> to vector<48x1xf32>
    %12 = vector.broadcast %11 : vector<48x1xf32> to vector<48x100xf32>
    %13 = arith.subf %5, %12 : vector<48x100xf32>
    %14 = arith.subf %13, %9 : vector<48x100xf32>
    %15 = math.exp %9 : vector<48x100xf32>
    %cst_6 = arith.constant dense<0.000000e+00> : vector<48xf32>
    %16 = vector.multi_reduction <add>, %15, %cst_6 [1] : vector<48x100xf32> to vector<48xf32>
    %17 = vector.shape_cast %16 : vector<48xf32> to vector<48x1xf32>
    %18 = math.log %17 : vector<48x1xf32>
    %19 = math.exp %13 : vector<48x100xf32>
    %cst_7 = arith.constant dense<0.000000e+00> : vector<48xf32>
    %20 = vector.multi_reduction <add>, %19, %cst_7 [1] : vector<48x100xf32> to vector<48xf32>
    %21 = vector.shape_cast %20 : vector<48xf32> to vector<48x1xf32>
    %22 = math.log %21 : vector<48x1xf32>
    %23 = arith.mulf %19, %14 : vector<48x100xf32>
    %cst_8 = arith.constant dense<0.000000e+00> : vector<48xf32>
    %24 = vector.multi_reduction <add>, %23, %cst_8 [1] : vector<48x100xf32> to vector<48xf32>
    %25 = vector.shape_cast %24 : vector<48xf32> to vector<48x1xf32>
    %26 = arith.divf %25, %21 : vector<48x1xf32>
    %27 = arith.subf %18, %22 : vector<48x1xf32>
    %28 = arith.addf %26, %27 : vector<48x1xf32>
    %c48_i32 = arith.constant 48 : i32
    %29 = arith.muli %arg0, %c48_i32 : i32
    %30 = tpu.iota {dimensions = array<i32: 0>} : vector<48x1xi32>
    %31 = vector.broadcast %29 : i32 to vector<48x1xi32>
    %32 = arith.addi %31, %30 : vector<48x1xi32>
    %c40_i32 = arith.constant 40 : i32
    %33 = vector.broadcast %c40_i32 : i32 to vector<48x1xi32>
    %34 = arith.cmpi slt, %32, %33 : vector<48x1xi32>
    %cst_9 = arith.constant 0.000000e+00 : f32
    %35 = vector.broadcast %cst_9 : f32 to vector<48x1xf32>
    %36 = arith.select %34, %28, %35 : vector<48x1xi1>, vector<48x1xf32>
    %37 = vector.shape_cast %36 : vector<48x1xf32> to vector<1x48x1xf32>
    %cst_10 = arith.constant dense<0.000000e+00> : vector<1xf32>
    %38 = vector.multi_reduction <add>, %37, %cst_10 [1, 2] : vector<1x48x1xf32> to vector<1xf32>
    %39 = vector.shape_cast %38 : vector<1xf32> to vector<1x1x1xf32>
    %40 = vector.extract %39[0, 0, 0] : f32 from vector<1x1x1xf32>
    %41 = vector.broadcast %40 : f32 to vector<1x8x128xf32>
    %c0_11 = arith.constant 0 : index
    %c0_12 = arith.constant 0 : index
    %c0_13 = arith.constant 0 : index
    %42 = vector.load %arg3[%c0_11, %c0_12, %c0_13] : memref<1x8x128xf32, #tpu.memory_space<vmem>>, vector<1x8x128xf32>
    tpu.vector_store %arg3[%c0_11, %c0_12, %c0_13], %41 {strides = array<i32>} : memref<1x8x128xf32, #tpu.memory_space<vmem>>, vector<1x8x128xf32>,
    return
  }
  func.func @transform_0(%arg0: i32) -> (i32, i32) {
    %c0_i32 = arith.constant 0 : i32
    %c0_i32_0 = arith.constant 0 : i32
    return %arg0, %c0_i32 : i32, i32
  }
  func.func @transform_1(%arg0: i32) -> (i32, i32) {
    %c0_i32 = arith.constant 0 : i32
    %c0_i32_0 = arith.constant 0 : i32
    return %arg0, %c0_i32 : i32, i32
  }
  func.func @transform_2(%arg0: i32) -> (i32, i32, i32) {
    %c0_i32 = arith.constant 0 : i32
    %c0_i32_0 = arith.constant 0 : i32
    %c0_i32_1 = arith.constant 0 : i32
    return %arg0, %c0_i32, %c0_i32_0 : i32, i32, i32
  }
}

</mosaic_0001>

<llo_original>
// kernel: tpu_custom_call.1
$region0: #{tpu_custom_call.1}
  #allocation0 [shape = 'u32[]', space=smem, size = 0x4, offset = 0x4, fixed_abs, tag = 'smem constant byte address 0x4 - core index']
  #allocation1 [shape = 'u32[144,128]{1,0:T(1,128)}', space=vmem, size = 0x12000, scoped, tag = 'internal scratch']
  %s0 = inlined_call_operand.hbm [shape: f32[40,100], index: 0, kind: input, shape index: {}]
  %s1 = inlined_call_operand.hbm [shape: f32[40,100], index: 1, kind: input, shape index: {}]
  %s2 = inlined_call_operand.hbm [shape: f32[1,8,128], index: 2, kind: output, shape index: {}]
  %s3 = sld [smem:[#allocation0]]
  $region26: #{tpu_custom_call.1} parent=0
    _
  %s5 = ssub.s32 1, %s3
  %s6 = scalar_select 0, %s5, %s3
  $region1: #{tpu_custom_call.1} parent=0
    #allocation2 [shape = 'u8[24576]{0}', space=vmem, size = 0x6000, scoped, tag = 'input window, operand 0, single buffered']
    #allocation3 [shape = 's32[1]{0}', space=sflag, size = 0x4, scoped, tag = 'scoped memory for tpu_custom_call.1']
    #allocation4 [shape = 's32[1]{0}', space=sflag, size = 0x4, scoped, tag = 'scoped memory for tpu_custom_call.1']
    #allocation5 [shape = 'u8[24576]{0}', space=vmem, size = 0x6000, scoped, tag = 'input window, operand 1, single buffered']
    #allocation6 [shape = 's32[1]{0}', space=sflag, size = 0x4, scoped, tag = 'scoped memory for tpu_custom_call.1']
    #allocation7 [shape = 'u8[4096]{0}', space=vmem, size = 0x1000, scoped, tag = 'output window, operand 0, single buffered']
    %7 = vsyncpa [#allocation3], 0
    %8 = vsyncpa [#allocation6], 0
    %9 = vsyncpa [#allocation4], 0
    // Predicated region
    $region2: #{tpu_custom_call.1} parent=1 // pred_check
      _
    $region3: #{tpu_custom_call.1} parent=1 // pred_check_branch
      %11 = sbr.rel (0) target = $region5
    $region4: #{tpu_custom_call.1} parent=1 // pred_region
      %s13 = ssub.s32 768, 640
      %14 = vsyncadd [#allocation3], %s13
      %s15 = sshll.u32 [#allocation2], 4
      %s16 = int_to_ptr.vmem [resolvable:$true] %s15
      %21 = dma.hbm_to_vmem [thread:$0]  %s0, 640, %s16, [#allocation3], 128, 128, 8
    $region5: #{tpu_custom_call.1} parent=1 // pred_fallthru
      _
    // Predicated region
    $region6: #{tpu_custom_call.1} parent=1 // pred_check
      _
    $region7: #{tpu_custom_call.1} parent=1 // pred_check_branch
      %23 = sbr.rel (0) target = $region9
    $region8: #{tpu_custom_call.1} parent=1 // pred_region
      %s25 = ssub.s32 768, 640
      %26 = vsyncadd [#allocation6], %s25
      %s27 = sshll.u32 [#allocation5], 4
      %s28 = int_to_ptr.vmem [resolvable:$true] %s27
      %33 = dma.hbm_to_vmem [thread:$0]  %s1, 640, %s28, [#allocation6], 128, 128, 8
    $region9: #{tpu_custom_call.1} parent=1 // pred_fallthru
      _
    // Predicated region
    $region10: #{tpu_custom_call.1} parent=1 // pred_check
      _
    $region11: #{tpu_custom_call.1} parent=1 // pred_check_branch
      %35 = sbr.rel (0) target = $region13
    $region12: #{tpu_custom_call.1} parent=1 // pred_region
      %36 = dma.done [#allocation3], 768
    $region13: #{tpu_custom_call.1} parent=1 // pred_fallthru
      _
    // Predicated region
    $region14: #{tpu_custom_call.1} parent=1 // pred_check
      _
    $region15: #{tpu_custom_call.1} parent=1 // pred_check_branch
      %38 = sbr.rel (0) target = $region17
    $region16: #{tpu_custom_call.1} parent=1 // pred_region
      %39 = dma.done [#allocation6], 768
    $region17: #{tpu_custom_call.1} parent=1 // pred_fallthru
      _
    %v40 = vld [vmem:[#allocation2] sm:$0xff]
    %v41 = vld [vmem:[#allocation2 + $0x8] sm:$0xff]
    %v42 = vld [vmem:[#allocation2 + $0x10] sm:$0xff]
    %v43 = vld [vmem:[#allocation2 + $0x18] sm:$0xff]
    %v44 = vld [vmem:[#allocation2 + $0x20] sm:$0xff]
    %v45 = vld [vmem:[#allocation2 + $0x28] sm:$0xff]
    %v46 = vmul.f32 %v40, 0.25
    %v47 = vmul.f32 %v41, 0.25
    %v48 = vmul.f32 %v42, 0.25
    %v49 = vmul.f32 %v43, 0.25
    %v50 = vmul.f32 %v44, 0.25
    %v51 = vmul.f32 %v45, 0.25
    %v52 = vld [vmem:[#allocation5] sm:$0xff]
    %v53 = vld [vmem:[#allocation5 + $0x8] sm:$0xff]
    %v54 = vld [vmem:[#allocation5 + $0x10] sm:$0xff]
    %v55 = vld [vmem:[#allocation5 + $0x18] sm:$0xff]
    %v56 = vld [vmem:[#allocation5 + $0x20] sm:$0xff]
    %v57 = vld [vmem:[#allocation5 + $0x28] sm:$0xff]
    %v58 = vmul.f32 %v52, 0.25
    %v59 = vmul.f32 %v53, 0.25
    %v60 = vmul.f32 %v54, 0.25
    %v61 = vmul.f32 %v55, 0.25
    %v62 = vmul.f32 %v56, 0.25
    %v63 = vmul.f32 %v57, 0.25
    %vm64 = vcmask 818176
    %v65 = vsel %vm64, %v46, -inf
    %66 = vmax.xlane.f32.xlu0 %v65
    %v67 = vpop.xlane.xlu0 %66
    %v68 = vsel %vm64, %v47, -inf
    %69 = vmax.xlane.f32.xlu0 %v68
    %v70 = vpop.xlane.xlu0 %69
    %v71 = vsel %vm64, %v48, -inf
    %72 = vmax.xlane.f32.xlu0 %v71
    %v73 = vpop.xlane.xlu0 %72
    %v74 = vsel %vm64, %v49, -inf
    %75 = vmax.xlane.f32.xlu0 %v74
    %v76 = vpop.xlane.xlu0 %75
    %v77 = vsel %vm64, %v50, -inf
    %78 = vmax.xlane.f32.xlu0 %v77
    %v79 = vpop.xlane.xlu0 %78
    %v80 = vsel %vm64, %v51, -inf
    %81 = vmax.xlane.f32.xlu0 %v80
    %v82 = vpop.xlane.xlu0 %81
    %v83 = vsub.f32 %v46, %v67
    %v84 = vsub.f32 %v47, %v70
    %v85 = vsub.f32 %v48, %v73
    %v86 = vsub.f32 %v49, %v76
    %v87 = vsub.f32 %v50, %v79
    %v88 = vsub.f32 %v51, %v82
    %v89 = vsel %vm64, %v58, -inf
    %90 = vmax.xlane.f32.xlu0 %v89
    %v91 = vpop.xlane.xlu0 %90
    %v92 = vsel %vm64, %v59, -inf
    %93 = vmax.xlane.f32.xlu0 %v92
    %v94 = vpop.xlane.xlu0 %93
    %v95 = vsel %vm64, %v60, -inf
    %96 = vmax.xlane.f32.xlu0 %v95
    %v97 = vpop.xlane.xlu0 %96
    %v98 = vsel %vm64, %v61, -inf
    %99 = vmax.xlane.f32.xlu0 %v98
    %v100 = vpop.xlane.xlu0 %99
    %v101 = vsel %vm64, %v62, -inf
    %102 = vmax.xlane.f32.xlu0 %v101
    %v103 = vpop.xlane.xlu0 %102
    %v104 = vsel %vm64, %v63, -inf
    %105 = vmax.xlane.f32.xlu0 %v104
    %v106 = vpop.xlane.xlu0 %105
    %v107 = vsub.f32 %v58, %v91
    %v108 = vsub.f32 %v59, %v94
    %v109 = vsub.f32 %v60, %v97
    %v110 = vsub.f32 %v61, %v100
    %v111 = vsub.f32 %v62, %v103
    %v112 = vsub.f32 %v63, %v106
    %v113 = vsub.f32 %v107, %v83
    %v114 = vsub.f32 %v108, %v84
    %v115 = vsub.f32 %v109, %v85
    %v116 = vsub.f32 %v110, %v86
    %v117 = vsub.f32 %v111, %v87
    %v118 = vsub.f32 %v112, %v88
    %v119 = vmul.f32 %v83, 1.442695
    %v120 = vpow.pop %v119
    %v121 = vmul.f32 %v84, 1.442695
    %v122 = vpow.pop %v121
    %v123 = vmul.f32 %v85, 1.442695
    %v124 = vpow.pop %v123
    %v125 = vmul.f32 %v86, 1.442695
    %v126 = vpow.pop %v125
    %v127 = vmul.f32 %v87, 1.442695
    %v128 = vpow.pop %v127
    %v129 = vmul.f32 %v88, 1.442695
    %v130 = vpow.pop %v129
    %v131 = vsel %vm64, %v120, 0.0
    %132 = vadd.xlane.f32.xlu0 %v131
    %v133 = vpop.xlane.xlu0 %132
    %v134 = vsel %vm64, %v122, 0.0
    %135 = vadd.xlane.f32.xlu0 %v134
    %v136 = vpop.xlane.xlu0 %135
    %v137 = vsel %vm64, %v124, 0.0
    %138 = vadd.xlane.f32.xlu0 %v137
    %v139 = vpop.xlane.xlu0 %138
    %v140 = vsel %vm64, %v126, 0.0
    %141 = vadd.xlane.f32.xlu0 %v140
    %v142 = vpop.xlane.xlu0 %141
    %v143 = vsel %vm64, %v128, 0.0
    %144 = vadd.xlane.f32.xlu0 %v143
    %v145 = vpop.xlane.xlu0 %144
    %v146 = vsel %vm64, %v130, 0.0
    %147 = vadd.xlane.f32.xlu0 %v146
    %v148 = vpop.xlane.xlu0 %147
    %v149 = vlog2.pop %v133
    %v150 = vmul.f32 %v149, 0.6931472
    %v151 = vlog2.pop %v136
    %v152 = vmul.f32 %v151, 0.6931472
    %v153 = vlog2.pop %v139
    %v154 = vmul.f32 %v153, 0.6931472
    %v155 = vlog2.pop %v142
    %v156 = vmul.f32 %v155, 0.6931472
    %v157 = vlog2.pop %v145
    %v158 = vmul.f32 %v157, 0.6931472
    %v159 = vlog2.pop %v148
    %v160 = vmul.f32 %v159, 0.6931472
    %v161 = vmul.f32 %v107, 1.442695
    %v162 = vpow.pop %v161
    %v163 = vmul.f32 %v108, 1.442695
    %v164 = vpow.pop %v163
    %v165 = vmul.f32 %v109, 1.442695
    %v166 = vpow.pop %v165
    %v167 = vmul.f32 %v110, 1.442695
    %v168 = vpow.pop %v167
    %v169 = vmul.f32 %v111, 1.442695
    %v170 = vpow.pop %v169
    %v171 = vmul.f32 %v112, 1.442695
    %v172 = vpow.pop %v171
    %v173 = vsel %vm64, %v162, 0.0
    %174 = vadd.xlane.f32.xlu0 %v173
    %v175 = vpop.xlane.xlu0 %174
    %v176 = vsel %vm64, %v164, 0.0
    %177 = vadd.xlane.f32.xlu0 %v176
    %v178 = vpop.xlane.xlu0 %177
    %v179 = vsel %vm64, %v166, 0.0
    %180 = vadd.xlane.f32.xlu0 %v179
    %v181 = vpop.xlane.xlu0 %180
    %v182 = vsel %vm64, %v168, 0.0
    %183 = vadd.xlane.f32.xlu0 %v182
    %v184 = vpop.xlane.xlu0 %183
    %v185 = vsel %vm64, %v170, 0.0
    %186 = vadd.xlane.f32.xlu0 %v185
    %v187 = vpop.xlane.xlu0 %186
    %v188 = vsel %vm64, %v172, 0.0
    %189 = vadd.xlane.f32.xlu0 %v188
    %v190 = vpop.xlane.xlu0 %189
    %v191 = vlog2.pop %v175
    %v192 = vmul.f32 %v191, 0.6931472
    %v193 = vlog2.pop %v178
    %v194 = vmul.f32 %v193, 0.6931472
    %v195 = vlog2.pop %v181
    %v196 = vmul.f32 %v195, 0.6931472
    %v197 = vlog2.pop %v184
    %v198 = vmul.f32 %v197, 0.6931472
    %v199 = vlog2.pop %v187
    %v200 = vmul.f32 %v199, 0.6931472
    %v201 = vlog2.pop %v190
    %v202 = vmul.f32 %v201, 0.6931472
    %v203 = vmul.f32 %v162, %v113
    %v204 = vmul.f32 %v164, %v114
    %v205 = vmul.f32 %v166, %v115
    %v206 = vmul.f32 %v168, %v116
    %v207 = vmul.f32 %v170, %v117
    %v208 = vmul.f32 %v172, %v118
    %v209 = vsel %vm64, %v203, 0.0
    %210 = vadd.xlane.f32.xlu0 %v209
    %v211 = vpop.xlane.xlu0 %210
    %v212 = vsel %vm64, %v204, 0.0
    %213 = vadd.xlane.f32.xlu0 %v212
    %v214 = vpop.xlane.xlu0 %213
    %v215 = vsel %vm64, %v205, 0.0
    %216 = vadd.xlane.f32.xlu0 %v215
    %v217 = vpop.xlane.xlu0 %216
    %v218 = vsel %vm64, %v206, 0.0
    %219 = vadd.xlane.f32.xlu0 %v218
    %v220 = vpop.xlane.xlu0 %219
    %v221 = vsel %vm64, %v207, 0.0
    %222 = vadd.xlane.f32.xlu0 %v221
    %v223 = vpop.xlane.xlu0 %222
    %v224 = vsel %vm64, %v208, 0.0
    %225 = vadd.xlane.f32.xlu0 %v224
    %v226 = vpop.xlane.xlu0 %225
    %v227 = vrcp.pop %v175
    %v228 = vmul.f32 %v211, %v227
    %v229 = vrcp.pop %v178
    %v230 = vmul.f32 %v214, %v229
    %v231 = vrcp.pop %v181
    %v232 = vmul.f32 %v217, %v231
    %v233 = vrcp.pop %v184
    %v234 = vmul.f32 %v220, %v233
    %v235 = vrcp.pop %v187
    %v236 = vmul.f32 %v223, %v235
    %v237 = vrcp.pop %v190
    %v238 = vmul.f32 %v226, %v237
    %v239 = vsub.f32 %v150, %v192
    %v240 = vsub.f32 %v152, %v194
    %v241 = vsub.f32 %v154, %v196
    %v242 = vsub.f32 %v156, %v198
    %v243 = vsub.f32 %v158, %v200
    %v244 = vsub.f32 %v160, %v202
    %v245 = vadd.f32 %v228, %v239
    %v246 = vadd.f32 %v230, %v240
    %v247 = vadd.f32 %v232, %v241
    %v248 = vadd.f32 %v234, %v242
    %v249 = vadd.f32 %v236, %v243
    %v250 = vadd.f32 %v238, %v244
    %s251 = smul.u32 0, 48
    %v252 = vlaneseq
    %v253 = vshrl.u32 %v252, 7
    %v254 = vadd.s32 %v253, 8
    %v255 = vadd.s32 %v253, 16
    %v256 = vadd.s32 %v253, 24
    %v257 = vadd.s32 %v253, 32
    %v258 = vadd.s32 %v253, 40
    %v259 = vstv %s251
    %v260 = vadd.s32 %v259, %v253
    %v261 = vadd.s32 %v259, %v254
    %v262 = vadd.s32 %v259, %v255
    %v263 = vadd.s32 %v259, %v256
    %v264 = vadd.s32 %v259, %v257
    %v265 = vadd.s32 %v259, %v258
    %vm266 = vcmp.lt.s32.totalorder %v260, 40
    %vm267 = vcmp.lt.s32.totalorder %v261, 40
    %vm268 = vcmp.lt.s32.totalorder %v262, 40
    %vm269 = vcmp.lt.s32.totalorder %v263, 40
    %vm270 = vcmp.lt.s32.totalorder %v264, 40
    %vm271 = vcmp.lt.s32.totalorder %v265, 40
    %v272 = vsel %vm266, %v245, 0.0
    %v273 = vsel %vm267, %v246, 0.0
    %v274 = vsel %vm268, %v247, 0.0
    %v275 = vsel %vm269, %v248, 0.0
    %v276 = vsel %vm270, %v249, 0.0
    %v277 = vsel %vm271, %v250, 0.0
    %vm278 = vcmask 7168
    %v279 = vsel %vm278, %v272, 0.0
    %v280 = vsel %vm278, %v273, 0.0
    %v281 = vadd.f32 %v279, %v280
    %v282 = vsel %vm278, %v274, 0.0
    %v283 = vadd.f32 %v281, %v282
    %v284 = vsel %vm278, %v275, 0.0
    %v285 = vadd.f32 %v283, %v284
    %v286 = vsel %vm278, %v276, 0.0
    %v287 = vadd.f32 %v285, %v286
    %v288 = vsel %vm278, %v277, 0.0
    %v289 = vadd.f32 %v287, %v288
    %290 = vadd.xlane.f32.xlu0 %v289
    %v291 = vpop.xlane.xlu0 %290
    %v292 = vrot.slane %v291, 4
    %v293 = vadd.f32 %v291, %v292
    %v294 = vrot.slane %v293, 2
    %v295 = vadd.f32 %v293, %v294
    %v296 = vrot.slane %v295, 1
    %v297 = vadd.f32 %v295, %v296
    %s298 = vtos %v297
    %v299 = vstv %s298
    %300 = vst [vmem:[#allocation7] sm:$0xff] %v299
    // Predicated region
    $region18: #{tpu_custom_call.1} parent=1 // pred_check
      _
    $region19: #{tpu_custom_call.1} parent=1 // pred_check_branch
      %302 = sbr.rel (0) target = $region21
    $region20: #{tpu_custom_call.1} parent=1 // pred_region
      %s304 = ssub.s32 128, 128
      %305 = vsyncadd [#allocation4], %s304
      %s307 = sshll.u32 [#allocation7], 4
      %s308 = int_to_ptr.vmem [resolvable:$true] %s307
      %310 = dma.vmem_to_hbm [thread:$0]  %s308, 128, %s2, [#allocation4]
    $region21: #{tpu_custom_call.1} parent=1 // pred_fallthru
      _
    // Predicated region
    $region22: #{tpu_custom_call.1} parent=1 // pred_check
      _
    $region23: #{tpu_custom_call.1} parent=1 // pred_check_branch
      %312 = sbr.rel (0) target = $region25
    $region24: #{tpu_custom_call.1} parent=1 // pred_region
      %313 = dma.done [#allocation4], 128
    $region25: #{tpu_custom_call.1} parent=1 // pred_fallthru
      _
    %314 = vsyncpa [#allocation3], 1
    %315 = vsyncpa [#allocation6], 1
    %316 = vsyncpa [#allocation4], 1

</llo_original>
